<compile_context>
chip_gen: v5e
topology: v5e:2x2
jax: 0.10.0
libtpu: 0.0.40
codegen_flags: <defaults>
</compile_context>

<pallas_src>
import jax
import jax.numpy as jnp
from jax import lax
from jax.experimental import pallas as pl
from jax.experimental.pallas import tpu as pltpu


def _pick_tile(dim, target, align):
    """Largest tile <= target that divides dim and is a multiple of `align`.

    Falls back to the full dim (always a legal TPU block shape).  `align` is
    128 for lane (last) dims, 8/16 (f32/bf16) for sublane (second-last) dims.
    """
    if dim <= target:
        return dim
    t = (target // align) * align
    while t >= align:
        if dim % t == 0:
            return t
        t -= align
    return dim


# --------------------------------------------------------------------------
# Stage 1: LayerNorm over D + two projections, row-tiled.
#   a_out = (LN(x) @ w2s) + b2s   (linear2, pre-scaled by 1/N)   -> bf16
#   b_out = (LN(x) @ w1t) + b1    (linear1)                      -> bf16
# --------------------------------------------------------------------------
def _ln_proj_kernel(m_ref, gamma_ref, beta_ref, w2s_ref, b2s_ref, w1_ref, b1_ref,
                    a_ref, b_ref):
    x = m_ref[...].astype(jnp.float32)                       # (tr, D)
    mu = jnp.mean(x, axis=-1, keepdims=True)
    xc = x - mu
    var = jnp.mean(xc * xc, axis=-1, keepdims=True)
    o = xc * lax.rsqrt(var + 1e-5)                            # LayerNorm eps=1e-5
    o = o * gamma_ref[...] + beta_ref[...]                    # (tr, D)
    a = jnp.dot(o, w2s_ref[...], preferred_element_type=jnp.float32) + b2s_ref[...]
    b = jnp.dot(o, w1_ref[...], preferred_element_type=jnp.float32) + b1_ref[...]
    a_ref[...] = a.astype(a_ref.dtype)                        # single f32->bf16 cast at store
    b_ref[...] = b.astype(b_ref.dtype)


# --------------------------------------------------------------------------
# Stage 2 (no reduction axis): G = aT @ b, one (tm, tn) output tile per step.
# aT block index depends only on i -> the LHS tile stays resident across j.
# --------------------------------------------------------------------------
def _opm_nok_kernel(a_ref, b_ref, g_ref):
    g_ref[...] = jnp.dot(a_ref[...], b_ref[...],
                         preferred_element_type=jnp.float32).astype(g_ref.dtype)


# --------------------------------------------------------------------------
# Stage 2 (large-N fallback): 3-axis tiled matmul with f32 VMEM accumulator.
# --------------------------------------------------------------------------
def _opm_acc_kernel(a_ref, b_ref, g_ref, acc_ref):
    @pl.when(pl.program_id(2) == 0)
    def _():
        acc_ref[...] = jnp.zeros_like(acc_ref)

    acc_ref[...] += jnp.dot(a_ref[...], b_ref[...],
                            preferred_element_type=jnp.float32)

    @pl.when(pl.program_id(2) == pl.num_programs(2) - 1)
    def _():
        g_ref[...] = acc_ref[...].astype(g_ref.dtype)


# --------------------------------------------------------------------------
# Stage 3: linear3 on the flattened (L*L, c*c) pair features (bf16 in, f32
# accumulate), small lane-padded weight resident across grid steps.
# --------------------------------------------------------------------------
def _linear3_kernel(x_ref, wt_ref, b_ref, o_ref):
    o_ref[...] = (jnp.dot(x_ref[...], wt_ref[...],
                          preferred_element_type=jnp.float32)
                  + b_ref[...]).astype(o_ref.dtype)


def msa_opm_forward(m, params):
    N, L, D = m.shape
    c = params["w1"].shape[0]
    z_dim = params["w3"].shape[0]
    inv_n = 1.0 / N

    gamma = params["gamma"].reshape(1, D).astype(jnp.float32)
    beta = params["beta"].reshape(1, D).astype(jnp.float32)
    # 1/N folded into the linear2 weight/bias: stage 2 needs no epilogue scale.
    w2s = (params["w2"].T * inv_n).astype(jnp.float32)        # (D, c)
    b2s = (params["b2"] * inv_n).reshape(1, c).astype(jnp.float32)
    w1t = params["w1"].T.astype(jnp.float32)                  # (D, c)
    b1 = params["b1"].reshape(1, c).astype(jnp.float32)

    # ---- stage 1: row-flattened LayerNorm + projections (two bf16 outputs) ----
    R = N * L
    m2 = m.reshape(R, D).astype(jnp.float32)
    tr = _pick_tile(R, 1024, 16)           # 16-aligned sublanes for bf16 stores
    a_flat, b_flat = pl.pallas_call(
        _ln_proj_kernel,
        out_shape=(jax.ShapeDtypeStruct((R, c), jnp.bfloat16),
                   jax.ShapeDtypeStruct((R, c), jnp.bfloat16)),
        grid=(R // tr,),
        in_specs=[pl.BlockSpec((tr, D), lambda i: (i, 0)),
                  pl.BlockSpec((1, D), lambda i: (0, 0)),
                  pl.BlockSpec((1, D), lambda i: (0, 0)),
                  pl.BlockSpec((D, c), lambda i: (0, 0)),
                  pl.BlockSpec((1, c), lambda i: (0, 0)),
                  pl.BlockSpec((D, c), lambda i: (0, 0)),
                  pl.BlockSpec((1, c), lambda i: (0, 0))],
        out_specs=[pl.BlockSpec((tr, c), lambda i: (i, 0)),
                   pl.BlockSpec((tr, c), lambda i: (i, 0))],
        compiler_params=pltpu.CompilerParams(dimension_semantics=("parallel",)),
    )(m2, gamma, beta, w2s, b2s, w1t, b1)

    # Zero-copy views: (N*L, c) -> (N, L*c).  One small one-time XLA transpose
    # of the LHS to (Lc, N) so stage 2 is the MXU-native (M,K)x(K,N) form.
    Lc = L * c
    a2 = a_flat.reshape(N, Lc)             # pre-scaled by 1/N
    b2 = b_flat.reshape(N, Lc)
    aT = a2.T                              # (Lc, N), |a| << |G|

    # ---- stage 2: outer-product mean as a big matmul, bf16 G output ----
    tm = _pick_tile(Lc, 1024, 128)
    tn = _pick_tile(Lc, 1024, 128)
    # Estimated VMEM for the no-reduction-axis path (bf16, double-buffered).
    nok_bytes = 2 * 2 * (tm * N + N * tn + tm * tn)
    if nok_bytes <= 24 * 1024 * 1024:
        # Typical case: whole N fits -> no k axis, no accumulator, LHS tile
        # resident across the inner j sweep.
        g = pl.pallas_call(
            _opm_nok_kernel,
            out_shape=jax.ShapeDtypeStruct((Lc, Lc), jnp.bfloat16),
            grid=(Lc // tm, Lc // tn),
            in_specs=[pl.BlockSpec((tm, N), lambda i, j: (i, 0)),
                      pl.BlockSpec((N, tn), lambda i, j: (0, j))],
            out_specs=pl.BlockSpec((tm, tn), lambda i, j: (i, j)),
            compiler_params=pltpu.CompilerParams(
                dimension_semantics=("parallel", "parallel")),
        )(aT, b2)
    else:
        # Very large N: canonical 3-axis accumulator matmul.
        tk = _pick_tile(N, 512, 16)        # 16-aligned sublanes for bf16 inputs
        g = pl.pallas_call(
            _opm_acc_kernel,
            out_shape=jax.ShapeDtypeStruct((Lc, Lc), jnp.bfloat16),
            grid=(Lc // tm, Lc // tn, N // tk),
            in_specs=[pl.BlockSpec((tm, tk), lambda i, j, k: (i, k)),
                      pl.BlockSpec((tk, tn), lambda i, j, k: (k, j))],
            out_specs=pl.BlockSpec((tm, tn), lambda i, j, k: (i, j)),
            scratch_shapes=[pltpu.VMEM((tm, tn), jnp.float32)],
            compiler_params=pltpu.CompilerParams(
                dimension_semantics=("parallel", "parallel", "arbitrary")),
        )(aT, b2)

    # Layout glue (bf16): G[(i,a),(j,b)] -> X[i*L+j, a*c+b].  See TODO at top.
    x = g.reshape(L, c, L, c).transpose(0, 2, 1, 3).reshape(L * L, c * c)

    # ---- stage 3: row-tiled linear3, lane-padded to >=128 output columns ----
    cc = c * c
    z_pad = ((z_dim + 127) // 128) * 128
    w3t = jnp.pad(params["w3"].T.astype(jnp.bfloat16),
                  ((0, 0), (0, z_pad - z_dim)))               # (c*c, z_pad)
    b3 = jnp.pad(params["b3"].astype(jnp.float32).reshape(1, z_dim),
                 ((0, 0), (0, z_pad - z_dim)))                # (1, z_pad)
    LL = L * L
    tr3 = _pick_tile(LL, 1024, 16)
    out = pl.pallas_call(
        _linear3_kernel,
        out_shape=jax.ShapeDtypeStruct((LL, z_pad), jnp.float32),
        grid=(LL // tr3,),
        in_specs=[pl.BlockSpec((tr3, cc), lambda i: (i, 0)),
                  pl.BlockSpec((cc, z_pad), lambda i: (0, 0)),
                  pl.BlockSpec((1, z_pad), lambda i: (0, 0))],
        out_specs=pl.BlockSpec((tr3, z_pad), lambda i: (i, 0)),
        compiler_params=pltpu.CompilerParams(dimension_semantics=("parallel",)),
    )(x, w3t, b3)

    return out[:, :z_dim].reshape(L, L, z_dim)


# --------------------------------------------------------------------------
# Pure-JAX reference (mirrors the PyTorch forward exactly).
# --------------------------------------------------------------------------
def msa_opm_reference(m, params):
    N, L, D = m.shape
    mu = jnp.mean(m, axis=-1, keepdims=True)
    var = jnp.mean((m - mu) ** 2, axis=-1, keepdims=True)
    o = (m - mu) / jnp.sqrt(var + 1e-5) * params["gamma"] + params["beta"]
    a = o @ params["w2"].T + params["b2"]          # linear2
    b = o @ params["w1"].T + params["b1"]          # linear1
    op = jnp.einsum('nia,njb->nijab', a, b).mean(axis=0)      # (L, L, c, c)
    x = op.reshape(L, L, -1)
    return x @ params["w3"].T + params["b3"]


if __name__ == "__main__":
    N, L, m_dim, c, z_dim = 4, 8, 32, 12, 16

    key = jax.random.PRNGKey(0)
    k = jax.random.split(key, 8)
    m = jax.random.normal(k[0], (N, L, m_dim), jnp.float32)

    params = {
        "gamma": jnp.ones((m_dim,), jnp.float32),
        "beta": jnp.zeros((m_dim,), jnp.float32),
        "w1": 0.1 * jax.random.normal(k[1], (c, m_dim), jnp.float32),
        "b1": 0.1 * jax.random.normal(k[2], (c,), jnp.float32),
        "w2": 0.1 * jax.random.normal(k[3], (c, m_dim), jnp.float32),
        "b2": 0.1 * jax.random.normal(k[4], (c,), jnp.float32),
        "w3": 0.1 * jax.random.normal(k[5], (z_dim, c * c), jnp.float32),
        "b3": 0.1 * jax.random.normal(k[6], (z_dim,), jnp.float32),
    }

    out = jax.block_until_ready(msa_opm_forward(m, params))
    ref = jax.block_until_ready(msa_opm_reference(m, params))

    assert out.shape == (L, L, z_dim), out.shape
    assert jnp.allclose(out, ref, rtol=2e-2, atol=2e-2), (
        float(jnp.max(jnp.abs(out - ref))))
    print("KERNEL_OK")
</pallas_src>

<mosaic_0001>
module attributes {stable_mosaic.version = 11 : i64} {
  func.func @_ln_proj_kernel(%arg0: i32, %arg1: memref<32x32xf32, #tpu.memory_space<vmem>>, %arg2: memref<1x32xf32, #tpu.memory_space<vmem>>, %arg3: memref<1x32xf32, #tpu.memory_space<vmem>>, %arg4: memref<32x12xf32, #tpu.memory_space<vmem>>, %arg5: memref<1x12xf32, #tpu.memory_space<vmem>>, %arg6: memref<32x12xf32, #tpu.memory_space<vmem>>, %arg7: memref<1x12xf32, #tpu.memory_space<vmem>>, %arg8: memref<32x12xbf16, #tpu.memory_space<vmem>>, %arg9: memref<32x12xbf16, #tpu.memory_space<vmem>>) attributes {dimension_semantics = [#tpu.dimension_semantics<parallel>], iteration_bounds = array<i64: 1>, scalar_prefetch = 0 : i64, scratch_operands = 0 : i64, tpu.core_type = #tpu.core_type<tc>, window_params = [{transform_indices = @transform_0, window_bounds = array<i64: 32, 32>}, {pipeline_mode = #tpu.pipeline_mode<synchronous>, transform_indices = @transform_1, window_bounds = array<i64: 1, 32>}, {pipeline_mode = #tpu.pipeline_mode<synchronous>, transform_indices = @transform_2, window_bounds = array<i64: 1, 32>}, {pipeline_mode = #tpu.pipeline_mode<synchronous>, transform_indices = @transform_3, window_bounds = array<i64: 32, 12>}, {pipeline_mode = #tpu.pipeline_mode<synchronous>, transform_indices = @transform_4, window_bounds = array<i64: 1, 12>}, {pipeline_mode = #tpu.pipeline_mode<synchronous>, transform_indices = @transform_5, window_bounds = array<i64: 32, 12>}, {pipeline_mode = #tpu.pipeline_mode<synchronous>, transform_indices = @transform_6, window_bounds = array<i64: 1, 12>}, {transform_indices = @transform_7, window_bounds = array<i64: 32, 12>}, {transform_indices = @transform_8, window_bounds = array<i64: 32, 12>}]} {
    %c0 = arith.constant 0 : index
    %c0_0 = arith.constant 0 : index
    %0 = vector.load %arg1[%c0, %c0_0] : memref<32x32xf32, #tpu.memory_space<vmem>>, vector<32x32xf32>
    %cst = arith.constant dense<0.000000e+00> : vector<32xf32>
    %1 = vector.multi_reduction <add>, %0, %cst [1] : vector<32x32xf32> to vector<32xf32>
    %2 = vector.shape_cast %1 : vector<32xf32> to vector<32x1xf32>
    %cst_1 = arith.constant 3.200000e+01 : f32
    %3 = vector.broadcast %cst_1 : f32 to vector<32x1xf32>
    %4 = arith.divf %2, %3 : vector<32x1xf32>
    %5 = vector.broadcast %4 : vector<32x1xf32> to vector<32x32xf32>
    %6 = arith.subf %0, %5 : vector<32x32xf32>
    %7 = arith.mulf %6, %6 : vector<32x32xf32>
    %cst_2 = arith.constant dense<0.000000e+00> : vector<32xf32>
    %8 = vector.multi_reduction <add>, %7, %cst_2 [1] : vector<32x32xf32> to vector<32xf32>
    %9 = vector.shape_cast %8 : vector<32xf32> to vector<32x1xf32>
    %cst_3 = arith.constant 3.200000e+01 : f32
    %10 = vector.broadcast %cst_3 : f32 to vector<32x1xf32>
    %11 = arith.divf %9, %10 : vector<32x1xf32>
    %cst_4 = arith.constant 9.99999974E-6 : f32
    %12 = vector.broadcast %cst_4 : f32 to vector<32x1xf32>
    %13 = arith.addf %11, %12 : vector<32x1xf32>
    %14 = math.rsqrt %13 : vector<32x1xf32>
    %15 = vector.broadcast %14 : vector<32x1xf32> to vector<32x32xf32>
    %16 = arith.mulf %6, %15 : vector<32x32xf32>
    %c0_5 = arith.constant 0 : index
    %c0_6 = arith.constant 0 : index
    %17 = vector.load %arg2[%c0_5, %c0_6] : memref<1x32xf32, #tpu.memory_space<vmem>>, vector<1x32xf32>
    %18 = vector.broadcast %17 : vector<1x32xf32> to vector<32x32xf32>
    %19 = arith.mulf %16, %18 : vector<32x32xf32>
    %c0_7 = arith.constant 0 : index
    %c0_8 = arith.constant 0 : index
    %20 = vector.load %arg3[%c0_7, %c0_8] : memref<1x32xf32, #tpu.memory_space<vmem>>, vector<1x32xf32>
    %21 = vector.broadcast %20 : vector<1x32xf32> to vector<32x32xf32>
    %22 = arith.addf %19, %21 : vector<32x32xf32>
    %c0_9 = arith.constant 0 : index
    %c0_10 = arith.constant 0 : index
    %23 = vector.load %arg4[%c0_9, %c0_10] : memref<32x12xf32, #tpu.memory_space<vmem>>, vector<32x12xf32>
    %cst_11 = arith.constant dense<0.000000e+00> : vector<32x12xf32>
    %24 = tpu.matmul %22, %23, %cst_11 {dimension_numbers = #tpu.dot_dimension_numbers<[1], [0], [0], [1], [0, 0, 1, 1], [], []>} : vector<32x32xf32>, vector<32x12xf32>, vector<32x12xf32> -> vector<32x12xf32>
    %c0_12 = arith.constant 0 : index
    %c0_13 = arith.constant 0 : index
    %25 = vector.load %arg5[%c0_12, %c0_13] : memref<1x12xf32, #tpu.memory_space<vmem>>, vector<1x12xf32>
    %26 = vector.broadcast %25 : vector<1x12xf32> to vector<32x12xf32>
    %27 = arith.addf %24, %26 : vector<32x12xf32>
    %c0_14 = arith.constant 0 : index
    %c0_15 = arith.constant 0 : index
    %28 = vector.load %arg6[%c0_14, %c0_15] : memref<32x12xf32, #tpu.memory_space<vmem>>, vector<32x12xf32>
    %cst_16 = arith.constant dense<0.000000e+00> : vector<32x12xf32>
    %29 = tpu.matmul %22, %28, %cst_16 {dimension_numbers = #tpu.dot_dimension_numbers<[1], [0], [0], [1], [0, 0, 1, 1], [], []>} : vector<32x32xf32>, vector<32x12xf32>, vector<32x12xf32> -> vector<32x12xf32>
    %c0_17 = arith.constant 0 : index
    %c0_18 = arith.constant 0 : index
    %30 = vector.load %arg7[%c0_17, %c0_18] : memref<1x12xf32, #tpu.memory_space<vmem>>, vector<1x12xf32>
    %31 = vector.broadcast %30 : vector<1x12xf32> to vector<32x12xf32>
    %32 = arith.addf %29, %31 : vector<32x12xf32>
    %33 = arith.truncf %27 : vector<32x12xf32> to vector<32x12xbf16>
    %c0_19 = arith.constant 0 : index
    %c0_20 = arith.constant 0 : index
    %34 = vector.load %arg8[%c0_19, %c0_20] : memref<32x12xbf16, #tpu.memory_space<vmem>>, vector<32x12xbf16>
    tpu.vector_store %arg8[%c0_19, %c0_20], %33 {strides = array<i32>} : memref<32x12xbf16, #tpu.memory_space<vmem>>, vector<32x12xbf16>,
    %35 = arith.truncf %32 : vector<32x12xf32> to vector<32x12xbf16>
    %c0_21 = arith.constant 0 : index
    %c0_22 = arith.constant 0 : index
    %36 = vector.load %arg9[%c0_21, %c0_22] : memref<32x12xbf16, #tpu.memory_space<vmem>>, vector<32x12xbf16>
    tpu.vector_store %arg9[%c0_21, %c0_22], %35 {strides = array<i32>} : memref<32x12xbf16, #tpu.memory_space<vmem>>, vector<32x12xbf16>,
    return
  }
  func.func @transform_0(%arg0: i32) -> (i32, i32) {
    %c0_i32 = arith.constant 0 : i32
    %c0_i32_0 = arith.constant 0 : i32
    return %arg0, %c0_i32 : i32, i32
  }
  func.func @transform_1(%arg0: i32) -> (i32, i32) {
    %c0_i32 = arith.constant 0 : i32
    %c0_i32_0 = arith.constant 0 : i32
    %c0_i32_1 = arith.constant 0 : i32
    return %c0_i32, %c0_i32_0 : i32, i32
  }
  func.func @transform_2(%arg0: i32) -> (i32, i32) {
    %c0_i32 = arith.constant 0 : i32
    %c0_i32_0 = arith.constant 0 : i32
    %c0_i32_1 = arith.constant 0 : i32
    return %c0_i32, %c0_i32_0 : i32, i32
  }
  func.func @transform_3(%arg0: i32) -> (i32, i32) {
    %c0_i32 = arith.constant 0 : i32
    %c0_i32_0 = arith.constant 0 : i32
    %c0_i32_1 = arith.constant 0 : i32
    return %c0_i32, %c0_i32_0 : i32, i32
  }
  func.func @transform_4(%arg0: i32) -> (i32, i32) {
    %c0_i32 = arith.constant 0 : i32
    %c0_i32_0 = arith.constant 0 : i32
    %c0_i32_1 = arith.constant 0 : i32
    return %c0_i32, %c0_i32_0 : i32, i32
  }
  func.func @transform_5(%arg0: i32) -> (i32, i32) {
    %c0_i32 = arith.constant 0 : i32
    %c0_i32_0 = arith.constant 0 : i32
    %c0_i32_1 = arith.constant 0 : i32
    return %c0_i32, %c0_i32_0 : i32, i32
  }
  func.func @transform_6(%arg0: i32) -> (i32, i32) {
    %c0_i32 = arith.constant 0 : i32
    %c0_i32_0 = arith.constant 0 : i32
    %c0_i32_1 = arith.constant 0 : i32
    return %c0_i32, %c0_i32_0 : i32, i32
  }
  func.func @transform_7(%arg0: i32) -> (i32, i32) {
    %c0_i32 = arith.constant 0 : i32
    %c0_i32_0 = arith.constant 0 : i32
    return %arg0, %c0_i32 : i32, i32
  }
  func.func @transform_8(%arg0: i32) -> (i32, i32) {
    %c0_i32 = arith.constant 0 : i32
    %c0_i32_0 = arith.constant 0 : i32
    return %arg0, %c0_i32 : i32, i32
  }
}

</mosaic_0001>

<llo_original>
// kernel: tpu_custom_call.1
$region0: #{tpu_custom_call.1}
  #allocation0 [shape = 'u32[]', space=smem, size = 0x4, offset = 0x4, fixed_abs, tag = 'smem constant byte address 0x4 - core index']
  #allocation1 [shape = 'u32[72,128]{1,0:T(1,128)}', space=vmem, size = 0x9000, scoped, tag = 'internal scratch']
  %s0 = inlined_call_operand.vmem [shape: f32[32,32], index: 0, kind: input, shape index: {}]
  %s1 = inlined_call_operand.vmem [shape: f32[1,32], index: 1, kind: input, shape index: {}]
  %s2 = inlined_call_operand.vmem [shape: f32[1,32], index: 2, kind: input, shape index: {}]
  %s3 = inlined_call_operand.vmem [shape: f32[32,12], index: 3, kind: input, shape index: {}]
  %s4 = inlined_call_operand.vmem [shape: f32[1,12], index: 4, kind: input, shape index: {}]
  %s5 = inlined_call_operand.vmem [shape: f32[32,12], index: 5, kind: input, shape index: {}]
  %s6 = inlined_call_operand.vmem [shape: f32[1,12], index: 6, kind: input, shape index: {}]
  %s7 = inlined_call_operand.vmem [shape: bf16[32,12], index: 7, kind: output, shape index: {0}]
  %s8 = inlined_call_operand.vmem [shape: bf16[32,12], index: 8, kind: output, shape index: {1}]
  %9 = xla_tuple %s7, %s8
  %s10 = sld [smem:[#allocation0]]
  $region46: #{tpu_custom_call.1} parent=0
    _
  %s12 = ssub.s32 1, %s10
  %s13 = scalar_select 0, %s12, %s10
  // Predicated region
  $region2: #{tpu_custom_call.1} parent=0 // pred_check
    _
  $region3: #{tpu_custom_call.1} parent=0 // pred_check_branch
    %15 = sbr.rel (0) target = $region5
  $region4: #{tpu_custom_call.1} parent=0 // pred_region
    _
  $region5: #{tpu_custom_call.1} parent=0 // pred_fallthru
    _
  // Predicated region
  $region6: #{tpu_custom_call.1} parent=0 // pred_check
    _
  $region7: #{tpu_custom_call.1} parent=0 // pred_check_branch
    %17 = sbr.rel (0) target = $region9
  $region8: #{tpu_custom_call.1} parent=0 // pred_region
    _
  $region9: #{tpu_custom_call.1} parent=0 // pred_fallthru
    _
  // Predicated region
  $region10: #{tpu_custom_call.1} parent=0 // pred_check
    _
  $region11: #{tpu_custom_call.1} parent=0 // pred_check_branch
    %19 = sbr.rel (0) target = $region13
  $region12: #{tpu_custom_call.1} parent=0 // pred_region
    _
  $region13: #{tpu_custom_call.1} parent=0 // pred_fallthru
    _
  // Predicated region
  $region14: #{tpu_custom_call.1} parent=0 // pred_check
    _
  $region15: #{tpu_custom_call.1} parent=0 // pred_check_branch
    %21 = sbr.rel (0) target = $region17
  $region16: #{tpu_custom_call.1} parent=0 // pred_region
    _
  $region17: #{tpu_custom_call.1} parent=0 // pred_fallthru
    _
  // Predicated region
  $region18: #{tpu_custom_call.1} parent=0 // pred_check
    _
  $region19: #{tpu_custom_call.1} parent=0 // pred_check_branch
    %23 = sbr.rel (0) target = $region21
  $region20: #{tpu_custom_call.1} parent=0 // pred_region
    _
  $region21: #{tpu_custom_call.1} parent=0 // pred_fallthru
    _
  // Predicated region
  $region22: #{tpu_custom_call.1} parent=0 // pred_check
    _
  $region23: #{tpu_custom_call.1} parent=0 // pred_check_branch
    %25 = sbr.rel (0) target = $region25
  $region24: #{tpu_custom_call.1} parent=0 // pred_region
    _
  $region25: #{tpu_custom_call.1} parent=0 // pred_fallthru
    _
  // Predicated region
  $region26: #{tpu_custom_call.1} parent=0 // pred_check
    _
  $region27: #{tpu_custom_call.1} parent=0 // pred_check_branch
    %27 = sbr.rel (0) target = $region29
  $region28: #{tpu_custom_call.1} parent=0 // pred_region
    _
  $region29: #{tpu_custom_call.1} parent=0 // pred_fallthru
    _
  %v28 = vld [vmem:[%s0] sm:$0xff]
  %v29 = vld [vmem:[%s0 + $0x8] sm:$0xff]
  %v30 = vld [vmem:[%s0 + $0x10] sm:$0xff]
  %v31 = vld [vmem:[%s0 + $0x18] sm:$0xff]
  %vm32 = vcmask 261120
  %v33 = vsel %vm32, %v28, 0.0
  %34 = vadd.xlane.f32.xlu0 %v33
  %v35 = vpop.xlane.xlu0 %34
  %v36 = vsel %vm32, %v29, 0.0
  %37 = vadd.xlane.f32.xlu0 %v36
  %v38 = vpop.xlane.xlu0 %37
  %v39 = vsel %vm32, %v30, 0.0
  %40 = vadd.xlane.f32.xlu0 %v39
  %v41 = vpop.xlane.xlu0 %40
  %v42 = vsel %vm32, %v31, 0.0
  %43 = vadd.xlane.f32.xlu0 %v42
  %v44 = vpop.xlane.xlu0 %43
  %v45 = vrcp.pop 32.0
  %v46 = vmul.f32 32.0, %v45
  %v47 = vsub.f32 1.0, %v46
  %v48 = vmul.f32 %v45, %v47
  %v49 = vadd.f32 %v45, %v48
  %vm50 = vweird.f32 %v45
  %v51 = vsel %vm50, %v45, %v49
  %v52 = vmul.f32 %v35, %v51
  %v53 = vmul.f32 %v38, %v51
  %v54 = vmul.f32 %v41, %v51
  %v55 = vmul.f32 %v44, %v51
  %v56 = vsub.f32 %v28, %v52
  %v57 = vsub.f32 %v29, %v53
  %v58 = vsub.f32 %v30, %v54
  %v59 = vsub.f32 %v31, %v55
  %v60 = vmul.f32 %v56, %v56
  %v61 = vmul.f32 %v57, %v57
  %v62 = vmul.f32 %v58, %v58
  %v63 = vmul.f32 %v59, %v59
  %v64 = vsel %vm32, %v60, 0.0
  %65 = vadd.xlane.f32.xlu0 %v64
  %v66 = vpop.xlane.xlu0 %65
  %v67 = vsel %vm32, %v61, 0.0
  %68 = vadd.xlane.f32.xlu0 %v67
  %v69 = vpop.xlane.xlu0 %68
  %v70 = vsel %vm32, %v62, 0.0
  %71 = vadd.xlane.f32.xlu0 %v70
  %v72 = vpop.xlane.xlu0 %71
  %v73 = vsel %vm32, %v63, 0.0
  %74 = vadd.xlane.f32.xlu0 %v73
  %v75 = vpop.xlane.xlu0 %74
  %v76 = vmul.f32 %v66, %v51
  %v77 = vmul.f32 %v69, %v51
  %v78 = vmul.f32 %v72, %v51
  %v79 = vmul.f32 %v75, %v51
  %v80 = vadd.f32 %v76, 1e-05
  %v81 = vadd.f32 %v77, 1e-05
  %v82 = vadd.f32 %v78, 1e-05
  %v83 = vadd.f32 %v79, 1e-05
  %v84 = vrsqrt.pop %v80
  %v85 = vmul.f32 %v84, %v80
  %v86 = vmul.f32 %v85, %v84
  %v87 = vmul.f32 0.5, %v86
  %v88 = vsub.f32 1.5, %v87
  %v89 = vmul.f32 %v84, %v88
  %vm90 = vweird.f32 %v80
  %vm91 = vweird.f32 %v84
  %vm92 = vmor %vm90, %vm91
  %v93 = vsel %vm92, %v84, %v89
  %v94 = vrsqrt.pop %v81
  %v95 = vmul.f32 %v94, %v81
  %v96 = vmul.f32 %v95, %v94
  %v97 = vmul.f32 0.5, %v96
  %v98 = vsub.f32 1.5, %v97
  %v99 = vmul.f32 %v94, %v98
  %vm100 = vweird.f32 %v81
  %vm101 = vweird.f32 %v94
  %vm102 = vmor %vm100, %vm101
  %v103 = vsel %vm102, %v94, %v99
  %v104 = vrsqrt.pop %v82
  %v105 = vmul.f32 %v104, %v82
  %v106 = vmul.f32 %v105, %v104
  %v107 = vmul.f32 0.5, %v106
  %v108 = vsub.f32 1.5, %v107
  %v109 = vmul.f32 %v104, %v108
  %vm110 = vweird.f32 %v82
  %vm111 = vweird.f32 %v104
  %vm112 = vmor %vm110, %vm111
  %v113 = vsel %vm112, %v104, %v109
  %v114 = vrsqrt.pop %v83
  %v115 = vmul.f32 %v114, %v83
  %v116 = vmul.f32 %v115, %v114
  %v117 = vmul.f32 0.5, %v116
  %v118 = vsub.f32 1.5, %v117
  %v119 = vmul.f32 %v114, %v118
  %vm120 = vweird.f32 %v83
  %vm121 = vweird.f32 %v114
  %vm122 = vmor %vm120, %vm121
  %v123 = vsel %vm122, %v114, %v119
  %v124 = vmul.f32 %v56, %v93
  %v125 = vmul.f32 %v57, %v103
  %v126 = vmul.f32 %v58, %v113
  %v127 = vmul.f32 %v59, %v123
  %v128 = vld [vmem:[%s1] sm:$0x1]
  %v130 = vperm.slane %v128, 0
  %v132 = vmul.f32 %v124, %v130
  %v133 = vmul.f32 %v125, %v130
  %v134 = vmul.f32 %v126, %v130
  %v135 = vmul.f32 %v127, %v130
  %v136 = vld [vmem:[%s2] sm:$0x1]
  %v138 = vperm.slane %v136, 0
  %v140 = vadd.f32 %v132, %v138
  %v141 = vadd.f32 %v133, %v138
  %v142 = vadd.f32 %v134, %v138
  %v143 = vadd.f32 %v135, %v138
  %v144 = vld [vmem:[%s3] sm:$0xff]
  %v145 = vld [vmem:[%s3 + $0x8] sm:$0xff]
  %v146 = vld [vmem:[%s3 + $0x10] sm:$0xff]
  %v147 = vld [vmem:[%s3 + $0x18] sm:$0xff]
  %v148 = vld [vmem:[%s4] sm:$0x1]
  %v150 = vperm.slane %v148, 0
  %v153 = vsel %vm32, %v140, 0
  %v156 = vsel %vm32, %v141, 0
  %v159 = vsel %vm32, %v142, 0
  %v162 = vsel %vm32, %v143, 0
  %164 = vmatpush.msra.mxu0 0.0
  %165 = vmatpush.msra.mxu0 0.0
  %166 = vmatpush.msra.mxu0 0.0
  %167 = vmatpush.msra.mxu0 0.0
  %168 = vmatpush.msra.mxu0 0.0
  %169 = vmatpush.msra.mxu0 0.0
  %170 = vmatpush.msra.mxu0 0.0
  %171 = vmatpush.msra.mxu0 0.0
  %172 = vmatpush.msra.mxu0 0.0
  %173 = vmatpush.msra.mxu0 0.0
  %174 = vmatpush.msra.mxu0 0.0
  %175 = vmatpush.msra.mxu0 0.0
  %176 = vmatpush.msra.mxu0 %v147
  %177 = vmatpush.msra.mxu0 %v146
  %178 = vmatpush.msra.mxu0 %v145
  %179 = vmatpush.msra.mxu0 %v144
  %180 = vmatmul.f32.gmra.mxu0 %v153
  %v181 = vpop.f32.mrf.mxu0
  %v182 = vadd.f32 %v150, %v181
  %183 = vmatmul.f32.gmra.mxu0 %v156
  %v184 = vpop.f32.mrf.mxu0
  %v185 = vadd.f32 %v150, %v184
  %186 = vmatmul.f32.gmra.mxu0 %v159
  %v187 = vpop.f32.mrf.mxu0
  %v188 = vadd.f32 %v150, %v187
  %189 = vmatmul.f32.gmra.mxu0 %v162
  %v190 = vpop.f32.mrf.mxu0
  %v191 = vadd.f32 %v150, %v190
  %192 = vdwg.mxu0
  %v193 = vld [vmem:[%s5] sm:$0xff]
  %v194 = vld [vmem:[%s5 + $0x8] sm:$0xff]
  %v195 = vld [vmem:[%s5 + $0x10] sm:$0xff]
  %v196 = vld [vmem:[%s5 + $0x18] sm:$0xff]
  %v197 = vld [vmem:[%s6] sm:$0x1]
  %v199 = vperm.slane %v197, 0
  %201 = vmatpush.msra.mxu0 0.0
  %202 = vmatpush.msra.mxu0 0.0
  %203 = vmatpush.msra.mxu0 0.0
  %204 = vmatpush.msra.mxu0 0.0
  %205 = vmatpush.msra.mxu0 0.0
  %206 = vmatpush.msra.mxu0 0.0
  %207 = vmatpush.msra.mxu0 0.0
  %208 = vmatpush.msra.mxu0 0.0
  %209 = vmatpush.msra.mxu0 0.0
  %210 = vmatpush.msra.mxu0 0.0
  %211 = vmatpush.msra.mxu0 0.0
  %212 = vmatpush.msra.mxu0 0.0
  %213 = vmatpush.msra.mxu0 %v196
  %214 = vmatpush.msra.mxu0 %v195
  %215 = vmatpush.msra.mxu0 %v194
  %216 = vmatpush.msra.mxu0 %v193
  %217 = vmatmul.f32.gmra.mxu0 %v153
  %v218 = vpop.f32.mrf.mxu0
  %v219 = vadd.f32 %v199, %v218
  %220 = vmatmul.f32.gmra.mxu0 %v156
  %v221 = vpop.f32.mrf.mxu0
  %v222 = vadd.f32 %v199, %v221
  %223 = vmatmul.f32.gmra.mxu0 %v159
  %v224 = vpop.f32.mrf.mxu0
  %v225 = vadd.f32 %v199, %v224
  %226 = vmatmul.f32.gmra.mxu0 %v162
  %v227 = vpop.f32.mrf.mxu0
  %v228 = vadd.f32 %v199, %v227
  %229 = vdwg.mxu0
  %v230 = vpack.c.bf16 %v182, %v182
  %v231 = vpack.c.bf16 %v185, %v185
  %v232 = vpack.c.bf16 %v188, %v188
  %v233 = vpack.c.bf16 %v191, %v191
  %vm234 = vcmask 93184
  %235 = vst.msk [vmem:[%s7] sm:$0xf] %vm234, %v230
  %236 = vst.msk [vmem:[%s7 + $0x4] sm:$0xf] %vm234, %v231
  %237 = vst.msk [vmem:[%s7 + $0x8] sm:$0xf] %vm234, %v232
  %238 = vst.msk [vmem:[%s7 + $0xc] sm:$0xf] %vm234, %v233
  %v239 = vpack.c.bf16 %v219, %v219
  %v240 = vpack.c.bf16 %v222, %v222
  %v241 = vpack.c.bf16 %v225, %v225
  %v242 = vpack.c.bf16 %v228, %v228
  %243 = vst.msk [vmem:[%s8] sm:$0xf] %vm234, %v239
  %244 = vst.msk [vmem:[%s8 + $0x4] sm:$0xf] %vm234, %v240
  %245 = vst.msk [vmem:[%s8 + $0x8] sm:$0xf] %vm234, %v241
  %246 = vst.msk [vmem:[%s8 + $0xc] sm:$0xf] %vm234, %v242
  // Predicated region
  $region30: #{tpu_custom_call.1} parent=0 // pred_check
    _
  $region31: #{tpu_custom_call.1} parent=0 // pred_check_branch
    %248 = sbr.rel (0) target = $region33
  $region32: #{tpu_custom_call.1} parent=0 // pred_region
    _
  $region33: #{tpu_custom_call.1} parent=0 // pred_fallthru
    _
  // Predicated region
  $region34: #{tpu_custom_call.1} parent=0 // pred_check
    _
  $region35: #{tpu_custom_call.1} parent=0 // pred_check_branch
    %250 = sbr.rel (0) target = $region37
  $region36: #{tpu_custom_call.1} parent=0 // pred_region
    _
  $region37: #{tpu_custom_call.1} parent=0 // pred_fallthru
    _
  // Predicated region
  $region38: #{tpu_custom_call.1} parent=0 // pred_check
    _
  $region39: #{tpu_custom_call.1} parent=0 // pred_check_branch
    %252 = sbr.rel (0) target = $region41
  $region40: #{tpu_custom_call.1} parent=0 // pred_region
    _
  $region41: #{tpu_custom_call.1} parent=0 // pred_fallthru
    _
  // Predicated region
  $region42: #{tpu_custom_call.1} parent=0 // pred_check
    _
  $region43: #{tpu_custom_call.1} parent=0 // pred_check_branch
    %254 = sbr.rel (0) target = $region45
  $region44: #{tpu_custom_call.1} parent=0 // pred_region
    _
  $region45: #{tpu_custom_call.1} parent=0 // pred_fallthru
    _

</llo_original>
